<compile_context>
chip_gen: v6e
topology: v6e:2x2x1
jax: 0.10.0
libtpu: 0.0.40
codegen_flags: <defaults>
</compile_context>

<pallas_src>
import jax
import jax.numpy as jnp
from jax.experimental import pallas as pl
from jax.experimental.pallas import tpu as pltpu

LANE = 128


def _round_up(n, m):
    return ((n + m - 1) // m) * m


def _mlp_logsoftmax_kernel(
    x_ref,    # (TB, Dp)  batch tile of flattened inputs (f32 or compute dtype)
    w1_ref,   # (Dp, Hp)  folded, pre-transposed Linear(D,H) weight
    b1_ref,   # (1,  Hp)  folded bias (f32)
    w2_ref,   # (Hp, Cp)  folded, pre-transposed Linear(H,C) weight
    b2_ref,   # (1,  Cp)  folded bias (f32; padded classes = -1e30)
    out_ref,  # (TB, Cp)  log-probabilities (f32)
):
    # Cast activations to the matmul operand dtype in-kernel (no-op if they
    # already match); the VPU cast hides under the MXU.
    x = x_ref[...].astype(w1_ref.dtype)

    # Layer 1 (identity reduction folded in): h = relu(x @ W1 + b1_eff).
    h = jnp.dot(x, w1_ref[...], preferred_element_type=jnp.float32)
    h = jnp.maximum(h + b1_ref[...], 0.0)

    # Layer 2 (identity reduction folded in): logits = h @ W2 + b2_eff.
    logits = jnp.dot(h.astype(w2_ref.dtype), w2_ref[...],
                     preferred_element_type=jnp.float32) + b2_ref[...]

    # Numerically stable log_softmax over the class axis (f32 epilogue; padded
    # classes carry logit -1e30 -> exp underflows to exactly 0).
    m = jnp.max(logits, axis=-1, keepdims=True)
    z = logits - m
    lse = jnp.log(jnp.sum(jnp.exp(z), axis=-1, keepdims=True))
    out_ref[...] = (z - lse).astype(out_ref.dtype)


def fold_and_pad_params(params, *, compute_dtype=jnp.bfloat16, lane=LANE):
    """One-time, host-side prep of the frozen parameters.

    Folds the identity reduction layers into the real Linears, pre-transposes
    weights to (in, out), and zero-pads every feature dim to a multiple of 128
    (lane width). Padded classes get a -1e30 bias so the softmax ignores them.

    bf16 operands are recommended on ALL generations (v5e's MXU is bf16-native;
    f32 operands decompose into multiple MXU passes); accumulation stays f32.
    """
    wid1, bid1, w1, b1, wid2, bid2, w2, b2 = params
    bid1 = bid1.reshape(1, -1)
    b1 = b1.reshape(1, -1)
    bid2 = bid2.reshape(1, -1)
    b2 = b2.reshape(1, -1)

    H, D = w1.shape
    C = w2.shape[0]

    # lin(reduce(x)) = (x @ wid.T + bid) @ w.T + b = x @ (w @ wid).T + (bid @ w.T + b)
    w1_eff = w1 @ wid1            # == w1 (wid1 is the identity), folded offline
    b1_eff = b1 + bid1 @ w1.T
    w2_eff = w2 @ wid2            # == w2
    b2_eff = b2 + bid2 @ w2.T

    w1t = w1_eff.T                # (D, H)  -> no in-kernel transpose
    w2t = w2_eff.T                # (H, C)

    Dp = _round_up(D, lane)
    Hp = _round_up(H, lane)
    Cp = _round_up(C, lane)

    w1t_p = jnp.zeros((Dp, Hp), jnp.float32).at[:D, :H].set(w1t)
    b1_p = jnp.zeros((1, Hp), jnp.float32).at[:, :H].set(b1_eff)
    w2t_p = jnp.zeros((Hp, Cp), jnp.float32).at[:H, :C].set(w2t)
    b2_p = jnp.full((1, Cp), -1e30, jnp.float32).at[:, :C].set(b2_eff)

    return {
        "w1t": w1t_p.astype(compute_dtype),   # bf16 recommended on v5e/v6e/v7x
        "b1": b1_p,                           # biases stay f32 (added post-acc)
        "w2t": w2t_p.astype(compute_dtype),
        "b2": b2_p,
        "D": D,
        "C": C,
    }


def _tpu_vmem_capacity_bytes(default=64 << 20):
    try:
        cap = getattr(pltpu.get_tpu_info(), "vmem_capacity_bytes", None)
        if cap:
            return int(cap)
    except Exception:
        pass
    return default  # conservative: fits every generation


def _default_block_b():
    # v7x: 64 MiB VMEM/TC and the resident weights are duplicated per core
    # under the "parallel" batch grid -> keep tiles modest.  v5e/v6e: 128 MiB
    # VMEM -> 512-row tiles (~85% of HBM roofline vs ~63% at 256).
    return 256 if _tpu_vmem_capacity_bytes() <= (64 << 20) else 512


def linear_reduction_mlp(x, folded, *, block_b=None):
    """x: (B, C, H, W) float32. Returns (B, num_classes) log-probabilities."""
    w1t, b1, w2t, b2 = folded["w1t"], folded["b1"], folded["w2t"], folded["b2"]
    D, C = folded["D"], folded["C"]

    B = x.shape[0]
    x_flat = x.reshape(B, -1)                     # PyTorch x.view(B, -1)
    assert x_flat.shape[1] == D, "flattened feature dim mismatch"

    Dp, Hp = w1t.shape
    Cp = w2t.shape[1]

    if block_b is None:
        block_b = _default_block_b()

    # Batch tile: spread B evenly over the tiles implied by block_b (avoids the
    # zero-row padding of round_up(B, block_b)); multiple of 16 sublane rows so
    # bf16 activations stay row-pack aligned.  The last tile may be ragged:
    # Pallas masks the out-of-bounds store, and garbage rows only feed their
    # own (discarded) output rows.
    num_tiles = max(1, -(-B // max(int(block_b), 1)))
    TB = _round_up(-(-B // num_tiles), 16)
    grid_b = -(-B // TB)

    # Activations: when D is already lane-aligned, hand the f32 input straight
    # to the kernel (cast in-kernel) instead of writing a padded copy to HBM
    # and reading it back.  Otherwise a padded copy is unavoidable -> write it
    # narrow (compute dtype).
    if D == Dp:
        x_in = x_flat
    else:
        x_in = jnp.zeros((B, Dp), w1t.dtype).at[:, :D].set(x_flat.astype(w1t.dtype))

    itemsize_w = jnp.dtype(w1t.dtype).itemsize
    itemsize_x = jnp.dtype(x_in.dtype).itemsize
    weight_bytes = (Dp * Hp + Hp * Cp) * itemsize_w      # resident, single-buffered
    bias_bytes = (Hp + Cp) * 4
    act_bytes = 2 * TB * Dp * itemsize_x                 # double-buffered x tiles
    out_bytes = 2 * TB * Cp * 4                          # double-buffered out tiles
    live_bytes = TB * (Hp + Cp) * 4                      # h / logits intermediates
    vmem_budget = int(1.3 * (weight_bytes + bias_bytes + act_bytes
                             + out_bytes + live_bytes)) + (4 << 20)
    vmem_limit = max(32 << 20, vmem_budget)
    vmem_limit = min(vmem_limit, int(0.9 * _tpu_vmem_capacity_bytes()))

    cost = pl.CostEstimate(
        flops=2 * B * (Dp * Hp + Hp * Cp),
        transcendentals=B * Cp,
        bytes_accessed=int(x_in.size) * itemsize_x + weight_bytes
                       + bias_bytes + B * Cp * 4,
    )

    def build(single_buffer_weights):
        # Constant index_map -> the pipeline already skips re-DMA of weights;
        # Buffered(1) additionally drops the second (dead) buffer, halving the
        # weight VMEM footprint.
        resident = ({"pipeline_mode": pl.Buffered(1)}
                    if single_buffer_weights else {})
        return pl.pallas_call(
            _mlp_logsoftmax_kernel,
            out_shape=jax.ShapeDtypeStruct((B, Cp), jnp.float32),
            grid=(grid_b,),
            in_specs=[
                # Activations: tiled over batch, double-buffered by the pipeline.
                # TODO(synk): pipeline_mode=pl.Buffered(3) here if v5e profiling
                # shows exposed activation DMA (lowest HBM bandwidth).
                pl.BlockSpec((TB, Dp), lambda i: (i, 0)),
                # Weights / biases: full-array blocks, resident across the grid.
                pl.BlockSpec((Dp, Hp), lambda i: (0, 0), **resident),
                pl.BlockSpec((1, Hp), lambda i: (0, 0), **resident),
                pl.BlockSpec((Hp, Cp), lambda i: (0, 0), **resident),
                pl.BlockSpec((1, Cp), lambda i: (0, 0), **resident),
            ],
            out_specs=pl.BlockSpec((TB, Cp), lambda i: (i, 0)),
            compiler_params=pltpu.CompilerParams(
                # Batch tiles are independent -> shard across TCs on megacore.
                dimension_semantics=("parallel",),
                vmem_limit_bytes=vmem_limit,
            ),
            cost_estimate=cost,
        )

    # TODO(synk): for very large flattened inputs where Dp*Hp no longer fits
    # resident in VMEM (notably v7x's 64 MiB/TC), add a K grid axis over Dp
    # with an f32 VMEM accumulator instead of shrinking the batch tile.
    try:
        out = build(True)(x_in, w1t, b1, w2t, b2)
    except Exception:
        # Buffered(1) is a VMEM optimization only; fall back to default
        # double-buffering if this JAX/Mosaic build rejects it.
        out = build(False)(x_in, w1t, b1, w2t, b2)

    return out[:, :C]


def make_params(key, D, H, C):
    """Parameter init mirroring the module's __init__ structure (all frozen)."""
    k = jax.random.split(key, 6)
    wid1 = jnp.eye(D, dtype=jnp.float32)                               # reduction 1
    bid1 = jax.random.uniform(k[0], (D,), jnp.float32, -0.1, 0.1)
    w1 = jax.random.normal(k[1], (H, D), jnp.float32) * 0.1            # Linear(D,H)
    b1 = jax.random.uniform(k[2], (H,), jnp.float32, -0.1, 0.1)
    wid2 = jnp.eye(H, dtype=jnp.float32)                               # reduction 2
    bid2 = jax.random.uniform(k[3], (H,), jnp.float32, -0.1, 0.1)
    w2 = jax.random.normal(k[4], (C, H), jnp.float32) * 0.1            # Linear(H,C)
    b2 = jax.random.uniform(k[5], (C,), jnp.float32, -0.1, 0.1)
    return (wid1, bid1, w1, b1, wid2, bid2, w2, b2)


def reference(x, params):
    """Plain-JAX reference of the un-folded module graph (source of truth)."""
    wid1, bid1, w1, b1, wid2, bid2, w2, b2 = params
    h = x.reshape(x.shape[0], -1)
    h = h @ wid1.T + bid1
    h = h @ w1.T + b1
    h = jnp.maximum(h, 0.0)
    h = h @ wid2.T + bid2
    logits = h @ w2.T + b2
    return jax.nn.log_softmax(logits, axis=1)


if __name__ == "__main__":
    key = jax.random.PRNGKey(0)
    k_x, k_p, k_x2, k_p2 = jax.random.split(key, 4)

    # Config A: lane-aligned D=128 -> direct f32 activation path (no host pad),
    # ragged batch tile (B=2 < TB).
    B, Cin, Hsp, Wsp = 2, 2, 8, 8
    D = Cin * Hsp * Wsp                  # 128
    H, C = 32, 10
    x = jax.random.normal(k_x, (B, Cin, Hsp, Wsp), jnp.float32)
    params = make_params(k_p, D, H, C)
    ref = reference(x, params)

    folded_f32 = fold_and_pad_params(params, compute_dtype=jnp.float32)
    out_f32 = jax.block_until_ready(linear_reduction_mlp(x, folded_f32))
    assert out_f32.shape == (B, C)
    assert jnp.allclose(out_f32, ref, atol=1e-4, rtol=1e-4), "f32 mismatch vs reference"

    # bf16 operands + f32 accumulation (recommended default on v5e/v6e/v7x).
    folded_bf16 = fold_and_pad_params(params, compute_dtype=jnp.bfloat16)
    out_bf16 = jax.block_until_ready(linear_reduction_mlp(x, folded_bf16))
    assert out_bf16.shape == (B, C)
    assert jnp.allclose(out_bf16, ref, atol=1e-1, rtol=5e-2), "bf16 mismatch vs reference"

    # Config B: non-lane-aligned D=64 -> padded-feature path, odd batch B=3.
    B2, Cin2, Hsp2, Wsp2 = 3, 1, 8, 8
    D2 = Cin2 * Hsp2 * Wsp2              # 64
    x2 = jax.random.normal(k_x2, (B2, Cin2, Hsp2, Wsp2), jnp.float32)
    params2 = make_params(k_p2, D2, H, C)
    ref2 = reference(x2, params2)
    out2 = jax.block_until_ready(
        linear_reduction_mlp(x2, fold_and_pad_params(params2, compute_dtype=jnp.float32)))
    assert out2.shape == (B2, C)
    assert jnp.allclose(out2, ref2, atol=1e-4, rtol=1e-4), "padded-D mismatch vs reference"

    print("KERNEL_OK")
</pallas_src>

<mosaic_0001>
module attributes {stable_mosaic.version = 11 : i64} {
  func.func @_mlp_logsoftmax_kernel(%arg0: i32, %arg1: memref<16x128xf32, #tpu.memory_space<vmem>>, %arg2: memref<128x128xf32, #tpu.memory_space<vmem>>, %arg3: memref<1x128xf32, #tpu.memory_space<vmem>>, %arg4: memref<128x128xf32, #tpu.memory_space<vmem>>, %arg5: memref<1x128xf32, #tpu.memory_space<vmem>>, %arg6: memref<16x128xf32, #tpu.memory_space<vmem>>) attributes {dimension_semantics = [#tpu.dimension_semantics<parallel>], iteration_bounds = array<i64: 1>, scalar_prefetch = 0 : i64, scratch_operands = 0 : i64, tpu.core_type = #tpu.core_type<tc>, window_params = [{transform_indices = @transform_0, window_bounds = array<i64: 16, 128>}, {pipeline_mode = #tpu.pipeline_mode<synchronous>, transform_indices = @transform_1, window_bounds = array<i64: 128, 128>}, {pipeline_mode = #tpu.pipeline_mode<synchronous>, transform_indices = @transform_2, window_bounds = array<i64: 1, 128>}, {pipeline_mode = #tpu.pipeline_mode<synchronous>, transform_indices = @transform_3, window_bounds = array<i64: 128, 128>}, {pipeline_mode = #tpu.pipeline_mode<synchronous>, transform_indices = @transform_4, window_bounds = array<i64: 1, 128>}, {transform_indices = @transform_5, window_bounds = array<i64: 16, 128>}]} {
    %c0 = arith.constant 0 : index
    %c0_0 = arith.constant 0 : index
    %0 = vector.load %arg1[%c0, %c0_0] : memref<16x128xf32, #tpu.memory_space<vmem>>, vector<16x128xf32>
    %c0_1 = arith.constant 0 : index
    %c0_2 = arith.constant 0 : index
    %1 = vector.load %arg2[%c0_1, %c0_2] : memref<128x128xf32, #tpu.memory_space<vmem>>, vector<128x128xf32>
    %cst = arith.constant dense<0.000000e+00> : vector<16x128xf32>
    %2 = tpu.matmul %0, %1, %cst {dimension_numbers = #tpu.dot_dimension_numbers<[1], [0], [0], [1], [0, 0, 1, 1], [], []>} : vector<16x128xf32>, vector<128x128xf32>, vector<16x128xf32> -> vector<16x128xf32>
    %c0_3 = arith.constant 0 : index
    %c0_4 = arith.constant 0 : index
    %3 = vector.load %arg3[%c0_3, %c0_4] : memref<1x128xf32, #tpu.memory_space<vmem>>, vector<1x128xf32>
    %4 = vector.broadcast %3 : vector<1x128xf32> to vector<16x128xf32>
    %5 = arith.addf %2, %4 : vector<16x128xf32>
    %cst_5 = arith.constant 0.000000e+00 : f32
    %6 = vector.broadcast %cst_5 : f32 to vector<16x128xf32>
    %7 = arith.maximumf %5, %6 : vector<16x128xf32>
    %c0_6 = arith.constant 0 : index
    %c0_7 = arith.constant 0 : index
    %8 = vector.load %arg4[%c0_6, %c0_7] : memref<128x128xf32, #tpu.memory_space<vmem>>, vector<128x128xf32>
    %cst_8 = arith.constant dense<0.000000e+00> : vector<16x128xf32>
    %9 = tpu.matmul %7, %8, %cst_8 {dimension_numbers = #tpu.dot_dimension_numbers<[1], [0], [0], [1], [0, 0, 1, 1], [], []>} : vector<16x128xf32>, vector<128x128xf32>, vector<16x128xf32> -> vector<16x128xf32>
    %c0_9 = arith.constant 0 : index
    %c0_10 = arith.constant 0 : index
    %10 = vector.load %arg5[%c0_9, %c0_10] : memref<1x128xf32, #tpu.memory_space<vmem>>, vector<1x128xf32>
    %11 = vector.broadcast %10 : vector<1x128xf32> to vector<16x128xf32>
    %12 = arith.addf %9, %11 : vector<16x128xf32>
    %cst_11 = arith.constant dense<0xFF800000> : vector<16xf32>
    %13 = vector.multi_reduction <maximumf>, %12, %cst_11 [1] : vector<16x128xf32> to vector<16xf32>
    %14 = vector.shape_cast %13 : vector<16xf32> to vector<16x1xf32>
    %15 = vector.broadcast %14 : vector<16x1xf32> to vector<16x128xf32>
    %16 = arith.subf %12, %15 : vector<16x128xf32>
    %17 = math.exp %16 : vector<16x128xf32>
    %cst_12 = arith.constant dense<0.000000e+00> : vector<16xf32>
    %18 = vector.multi_reduction <add>, %17, %cst_12 [1] : vector<16x128xf32> to vector<16xf32>
    %19 = vector.shape_cast %18 : vector<16xf32> to vector<16x1xf32>
    %20 = math.log %19 : vector<16x1xf32>
    %21 = vector.broadcast %20 : vector<16x1xf32> to vector<16x128xf32>
    %22 = arith.subf %16, %21 : vector<16x128xf32>
    %c0_13 = arith.constant 0 : index
    %c0_14 = arith.constant 0 : index
    %23 = vector.load %arg6[%c0_13, %c0_14] : memref<16x128xf32, #tpu.memory_space<vmem>>, vector<16x128xf32>
    tpu.vector_store %arg6[%c0_13, %c0_14], %22 {strides = array<i32>} : memref<16x128xf32, #tpu.memory_space<vmem>>, vector<16x128xf32>,
    return
  }
  func.func @transform_0(%arg0: i32) -> (i32, i32) {
    %c0_i32 = arith.constant 0 : i32
    %c0_i32_0 = arith.constant 0 : i32
    return %arg0, %c0_i32 : i32, i32
  }
  func.func @transform_1(%arg0: i32) -> (i32, i32) {
    %c0_i32 = arith.constant 0 : i32
    %c0_i32_0 = arith.constant 0 : i32
    %c0_i32_1 = arith.constant 0 : i32
    return %c0_i32, %c0_i32_0 : i32, i32
  }
  func.func @transform_2(%arg0: i32) -> (i32, i32) {
    %c0_i32 = arith.constant 0 : i32
    %c0_i32_0 = arith.constant 0 : i32
    %c0_i32_1 = arith.constant 0 : i32
    return %c0_i32, %c0_i32_0 : i32, i32
  }
  func.func @transform_3(%arg0: i32) -> (i32, i32) {
    %c0_i32 = arith.constant 0 : i32
    %c0_i32_0 = arith.constant 0 : i32
    %c0_i32_1 = arith.constant 0 : i32
    return %c0_i32, %c0_i32_0 : i32, i32
  }
  func.func @transform_4(%arg0: i32) -> (i32, i32) {
    %c0_i32 = arith.constant 0 : i32
    %c0_i32_0 = arith.constant 0 : i32
    %c0_i32_1 = arith.constant 0 : i32
    return %c0_i32, %c0_i32_0 : i32, i32
  }
  func.func @transform_5(%arg0: i32) -> (i32, i32) {
    %c0_i32 = arith.constant 0 : i32
    %c0_i32_0 = arith.constant 0 : i32
    return %arg0, %c0_i32 : i32, i32
  }
}

module attributes {stable_mosaic.version = 11 : i64} {
  func.func @_mlp_logsoftmax_kernel(%arg0: i32, %arg1: memref<16x128xf32, #tpu.memory_space<vmem>>, %arg2: memref<128x128xf32, #tpu.memory_space<vmem>>, %arg3: memref<1x128xf32, #tpu.memory_space<vmem>>, %arg4: memref<128x128xf32, #tpu.memory_space<vmem>>, %arg5: memref<1x128xf32, #tpu.memory_space<vmem>>, %arg6: memref<16x128xf32, #tpu.memory_space<vmem>>) attributes {dimension_semantics = [#tpu.dimension_semantics<parallel>], iteration_bounds = array<i64: 1>, scalar_prefetch = 0 : i64, scratch_operands = 0 : i64, tpu.core_type = #tpu.core_type<tc>, window_params = [{transform_indices = @transform_0, window_bounds = array<i64: 16, 128>}, {pipeline_mode = #tpu.pipeline_mode<synchronous>, transform_indices = @transform_1, window_bounds = array<i64: 128, 128>}, {pipeline_mode = #tpu.pipeline_mode<synchronous>, transform_indices = @transform_2, window_bounds = array<i64: 1, 128>}, {pipeline_mode = #tpu.pipeline_mode<synchronous>, transform_indices = @transform_3, window_bounds = array<i64: 128, 128>}, {pipeline_mode = #tpu.pipeline_mode<synchronous>, transform_indices = @transform_4, window_bounds = array<i64: 1, 128>}, {transform_indices = @transform_5, window_bounds = array<i64: 16, 128>}]} {
    %c0 = arith.constant 0 : index
    %c0_0 = arith.constant 0 : index
    %0 = vector.load %arg1[%c0, %c0_0] : memref<16x128xf32, #tpu.memory_space<vmem>>, vector<16x128xf32>
    %c0_1 = arith.constant 0 : index
    %c0_2 = arith.constant 0 : index
    %1 = vector.load %arg2[%c0_1, %c0_2] : memref<128x128xf32, #tpu.memory_space<vmem>>, vector<128x128xf32>
    %cst = arith.constant dense<0.000000e+00> : vector<16x128xf32>
    %2 = tpu.matmul %0, %1, %cst {dimension_numbers = #tpu.dot_dimension_numbers<[1], [0], [0], [1], [0, 0, 1, 1], [], []>} : vector<16x128xf32>, vector<128x128xf32>, vector<16x128xf32> -> vector<16x128xf32>
    %c0_3 = arith.constant 0 : index
    %c0_4 = arith.constant 0 : index
    %3 = vector.load %arg3[%c0_3, %c0_4] : memref<1x128xf32, #tpu.memory_space<vmem>>, vector<1x128xf32>
    %4 = vector.broadcast %3 : vector<1x128xf32> to vector<16x128xf32>
    %5 = arith.addf %2, %4 : vector<16x128xf32>
    %cst_5 = arith.constant 0.000000e+00 : f32
    %6 = vector.broadcast %cst_5 : f32 to vector<16x128xf32>
    %7 = arith.maximumf %5, %6 : vector<16x128xf32>
    %c0_6 = arith.constant 0 : index
    %c0_7 = arith.constant 0 : index
    %8 = vector.load %arg4[%c0_6, %c0_7] : memref<128x128xf32, #tpu.memory_space<vmem>>, vector<128x128xf32>
    %cst_8 = arith.constant dense<0.000000e+00> : vector<16x128xf32>
    %9 = tpu.matmul %7, %8, %cst_8 {dimension_numbers = #tpu.dot_dimension_numbers<[1], [0], [0], [1], [0, 0, 1, 1], [], []>} : vector<16x128xf32>, vector<128x128xf32>, vector<16x128xf32> -> vector<16x128xf32>
    %c0_9 = arith.constant 0 : index
    %c0_10 = arith.constant 0 : index
    %10 = vector.load %arg5[%c0_9, %c0_10] : memref<1x128xf32, #tpu.memory_space<vmem>>, vector<1x128xf32>
    %11 = vector.broadcast %10 : vector<1x128xf32> to vector<16x128xf32>
    %12 = arith.addf %9, %11 : vector<16x128xf32>
    %cst_11 = arith.constant dense<0xFF800000> : vector<16xf32>
    %13 = vector.multi_reduction <maximumf>, %12, %cst_11 [1] : vector<16x128xf32> to vector<16xf32>
    %14 = vector.shape_cast %13 : vector<16xf32> to vector<16x1xf32>
    %15 = vector.broadcast %14 : vector<16x1xf32> to vector<16x128xf32>
    %16 = arith.subf %12, %15 : vector<16x128xf32>
    %17 = math.exp %16 : vector<16x128xf32>
    %cst_12 = arith.constant dense<0.000000e+00> : vector<16xf32>
    %18 = vector.multi_reduction <add>, %17, %cst_12 [1] : vector<16x128xf32> to vector<16xf32>
    %19 = vector.shape_cast %18 : vector<16xf32> to vector<16x1xf32>
    %20 = math.log %19 : vector<16x1xf32>
    %21 = vector.broadcast %20 : vector<16x1xf32> to vector<16x128xf32>
    %22 = arith.subf %16, %21 : vector<16x128xf32>
    %c0_13 = arith.constant 0 : index
    %c0_14 = arith.constant 0 : index
    %23 = vector.load %arg6[%c0_13, %c0_14] : memref<16x128xf32, #tpu.memory_space<vmem>>, vector<16x128xf32>
    tpu.vector_store %arg6[%c0_13, %c0_14], %22 {strides = array<i32>} : memref<16x128xf32, #tpu.memory_space<vmem>>, vector<16x128xf32>,
    return
  }
  func.func @transform_0(%arg0: i32) -> (i32, i32) {
    %c0_i32 = arith.constant 0 : i32
    %c0_i32_0 = arith.constant 0 : i32
    return %arg0, %c0_i32 : i32, i32
  }
  func.func @transform_1(%arg0: i32) -> (i32, i32) {
    %c0_i32 = arith.constant 0 : i32
    %c0_i32_0 = arith.constant 0 : i32
    %c0_i32_1 = arith.constant 0 : i32
    return %c0_i32, %c0_i32_0 : i32, i32
  }
  func.func @transform_2(%arg0: i32) -> (i32, i32) {
    %c0_i32 = arith.constant 0 : i32
    %c0_i32_0 = arith.constant 0 : i32
    %c0_i32_1 = arith.constant 0 : i32
    return %c0_i32, %c0_i32_0 : i32, i32
  }
  func.func @transform_3(%arg0: i32) -> (i32, i32) {
    %c0_i32 = arith.constant 0 : i32
    %c0_i32_0 = arith.constant 0 : i32
    %c0_i32_1 = arith.constant 0 : i32
    return %c0_i32, %c0_i32_0 : i32, i32
  }
  func.func @transform_4(%arg0: i32) -> (i32, i32) {
    %c0_i32 = arith.constant 0 : i32
    %c0_i32_0 = arith.constant 0 : i32
    %c0_i32_1 = arith.constant 0 : i32
    return %c0_i32, %c0_i32_0 : i32, i32
  }
  func.func @transform_5(%arg0: i32) -> (i32, i32) {
    %c0_i32 = arith.constant 0 : i32
    %c0_i32_0 = arith.constant 0 : i32
    return %arg0, %c0_i32 : i32, i32
  }
}

</mosaic_0001>

<llo_original>
// kernel: tpu_custom_call.1
$region0: #{tpu_custom_call.1}
  #allocation0 [shape = 'u32[]', space=smem, size = 0x4, offset = 0x4, fixed_abs, tag = 'smem constant byte address 0x4 - core index']
  #allocation1 [shape = 'u32[144,128]{1,0:T(1,128)}', space=vmem, size = 0x12000, scoped, tag = 'internal scratch']
  %s0 = inlined_call_operand.hbm [shape: f32[2,128], index: 0, kind: input, shape index: {}]
  %s1 = inlined_call_operand.hbm [shape: f32[128,128], index: 1, kind: input, shape index: {}]
  %s2 = inlined_call_operand.vmem [shape: f32[1,128], index: 2, kind: input, shape index: {}]
  %s3 = inlined_call_operand.hbm [shape: f32[128,128], index: 3, kind: input, shape index: {}]
  %s4 = inlined_call_operand.vmem [shape: f32[1,128], index: 4, kind: input, shape index: {}]
  %s5 = inlined_call_operand.hbm [shape: f32[2,128], index: 5, kind: output, shape index: {}]
  %s6 = sld [smem:[#allocation0]]
  $region42: #{tpu_custom_call.1} parent=0
    _
  %s8 = ssub.s32 1, %s6
  %s9 = scalar_select 0, %s8, %s6
  $region1: #{tpu_custom_call.1} parent=0
    #allocation2 [shape = 'u8[8192]{0}', space=vmem, size = 0x2000, scoped, tag = 'input window, operand 0, single buffered']
    #allocation3 [shape = 's32[1]{0}', space=sflag, size = 0x4, scoped, tag = 'scoped memory for tpu_custom_call.1']
    #allocation4 [shape = 's32[1]{0}', space=sflag, size = 0x4, scoped, tag = 'scoped memory for tpu_custom_call.1']
    #allocation5 [shape = 'u8[65536]{0}', space=vmem, size = 0x10000, scoped, tag = 'input window, operand 1, single buffered']
    #allocation6 [shape = 's32[1]{0}', space=sflag, size = 0x4, scoped, tag = 'scoped memory for tpu_custom_call.1']
    #allocation7 [shape = 'u8[65536]{0}', space=vmem, size = 0x10000, scoped, tag = 'input window, operand 3, single buffered']
    #allocation8 [shape = 'u8[8192]{0}', space=vmem, size = 0x2000, scoped, tag = 'output window, operand 0, single buffered']
    %10 = vsyncpa [#allocation3], 0
    %11 = vsyncpa [#allocation6], 0
    %12 = vsyncpa [#allocation4], 0
    // Predicated region
    $region2: #{tpu_custom_call.1} parent=1 // pred_check
      _
    $region3: #{tpu_custom_call.1} parent=1 // pred_check_branch
      %14 = sbr.rel (0) target = $region5
    $region4: #{tpu_custom_call.1} parent=1 // pred_region
      %s16 = ssub.s32 256, 32
      %17 = vsyncadd [#allocation3], %s16
      %s18 = sshll.u32 [#allocation2], 4
      %s19 = int_to_ptr.vmem [resolvable:$true] %s18
      %24 = dma.hbm_to_vmem [thread:$0]  %s0, 32, %s19, [#allocation3], 32, 32, 2
    $region5: #{tpu_custom_call.1} parent=1 // pred_fallthru
      _
    // Predicated region
    $region6: #{tpu_custom_call.1} parent=1 // pred_check
      _
    $region7: #{tpu_custom_call.1} parent=1 // pred_check_branch
      %26 = sbr.rel (0) target = $region9
    $region8: #{tpu_custom_call.1} parent=1 // pred_region
      %s28 = ssub.s32 2048, 2048
      %29 = vsyncadd [#allocation6], %s28
      %s30 = sshll.u32 [#allocation5], 4
      %s31 = int_to_ptr.vmem [resolvable:$true] %s30
      %36 = dma.hbm_to_vmem [thread:$0]  %s1, 2048, %s31, [#allocation6], 128, 128, 8
    $region9: #{tpu_custom_call.1} parent=1 // pred_fallthru
      _
    // Predicated region
    $region10: #{tpu_custom_call.1} parent=1 // pred_check
      _
    $region11: #{tpu_custom_call.1} parent=1 // pred_check_branch
      %38 = sbr.rel (0) target = $region13
    $region12: #{tpu_custom_call.1} parent=1 // pred_region
      _
    $region13: #{tpu_custom_call.1} parent=1 // pred_fallthru
      _
    // Predicated region
    $region14: #{tpu_custom_call.1} parent=1 // pred_check
      _
    $region15: #{tpu_custom_call.1} parent=1 // pred_check_branch
      %40 = sbr.rel (0) target = $region17
    $region16: #{tpu_custom_call.1} parent=1 // pred_region
      %s42 = ssub.s32 2048, 2048
      %43 = vsyncadd [#allocation6], %s42
      %s44 = sshll.u32 [#allocation7], 4
      %s45 = int_to_ptr.vmem [resolvable:$true] %s44
      %50 = dma.hbm_to_vmem [thread:$0]  %s3, 2048, %s45, [#allocation6], 128, 128, 8
    $region17: #{tpu_custom_call.1} parent=1 // pred_fallthru
      _
    // Predicated region
    $region18: #{tpu_custom_call.1} parent=1 // pred_check
      _
    $region19: #{tpu_custom_call.1} parent=1 // pred_check_branch
      %52 = sbr.rel (0) target = $region21
    $region20: #{tpu_custom_call.1} parent=1 // pred_region
      _
    $region21: #{tpu_custom_call.1} parent=1 // pred_fallthru
      _
    // Predicated region
    $region22: #{tpu_custom_call.1} parent=1 // pred_check
      _
    $region23: #{tpu_custom_call.1} parent=1 // pred_check_branch
      %54 = sbr.rel (0) target = $region25
    $region24: #{tpu_custom_call.1} parent=1 // pred_region
      %55 = dma.done [#allocation3], 256
    $region25: #{tpu_custom_call.1} parent=1 // pred_fallthru
      _
    // Predicated region
    $region26: #{tpu_custom_call.1} parent=1 // pred_check
      _
    $region27: #{tpu_custom_call.1} parent=1 // pred_check_branch
      %57 = sbr.rel (0) target = $region29
    $region28: #{tpu_custom_call.1} parent=1 // pred_region
      %58 = dma.done [#allocation6], 2048
    $region29: #{tpu_custom_call.1} parent=1 // pred_fallthru
      _
    // Predicated region
    $region30: #{tpu_custom_call.1} parent=1 // pred_check
      _
    $region31: #{tpu_custom_call.1} parent=1 // pred_check_branch
      %60 = sbr.rel (0) target = $region33
    $region32: #{tpu_custom_call.1} parent=1 // pred_region
      %61 = dma.done [#allocation6], 2048
    $region33: #{tpu_custom_call.1} parent=1 // pred_fallthru
      _
    %v62 = vld [vmem:[#allocation2] sm:$0xff]
    %v63 = vld [vmem:[#allocation2 + $0x8] sm:$0xff]
    %v64 = vld [vmem:[#allocation5] sm:$0xff]
    %v65 = vld [vmem:[#allocation5 + $0x8] sm:$0xff]
    %v66 = vld [vmem:[#allocation5 + $0x10] sm:$0xff]
    %v67 = vld [vmem:[#allocation5 + $0x18] sm:$0xff]
    %v68 = vld [vmem:[#allocation5 + $0x20] sm:$0xff]
    %v69 = vld [vmem:[#allocation5 + $0x28] sm:$0xff]
    %v70 = vld [vmem:[#allocation5 + $0x30] sm:$0xff]
    %v71 = vld [vmem:[#allocation5 + $0x38] sm:$0xff]
    %v72 = vld [vmem:[#allocation5 + $0x40] sm:$0xff]
    %v73 = vld [vmem:[#allocation5 + $0x48] sm:$0xff]
    %v74 = vld [vmem:[#allocation5 + $0x50] sm:$0xff]
    %v75 = vld [vmem:[#allocation5 + $0x58] sm:$0xff]
    %v76 = vld [vmem:[#allocation5 + $0x60] sm:$0xff]
    %v77 = vld [vmem:[#allocation5 + $0x68] sm:$0xff]
    %v78 = vld [vmem:[#allocation5 + $0x70] sm:$0xff]
    %v79 = vld [vmem:[#allocation5 + $0x78] sm:$0xff]
    %v80 = vld [vmem:[%s2] sm:$0x1]
    %v82 = vlaneseq
    %v83 = vshrl.u32 %v82, 7
    %v84 = vsub.s32 0, %v83
    %v85 = vrot.slane %v80, %v84
    %87 = vmatprep.subr.mxu0 0.0
    %88 = vmatpush1.msra.mxu0 %v79
    %89 = vmatprep.subr.mxu0 0.0
    %90 = vmatpush1.msra.mxu0 %v78
    %91 = vmatprep.subr.mxu0 0.0
    %92 = vmatpush1.msra.mxu0 %v77
    %93 = vmatprep.subr.mxu0 0.0
    %94 = vmatpush1.msra.mxu0 %v76
    %95 = vmatprep.subr.mxu0 0.0
    %96 = vmatpush1.msra.mxu0 %v75
    %97 = vmatprep.subr.mxu0 0.0
    %98 = vmatpush1.msra.mxu0 %v74
    %99 = vmatprep.subr.mxu0 0.0
    %100 = vmatpush1.msra.mxu0 %v73
    %101 = vmatprep.subr.mxu0 0.0
    %102 = vmatpush1.msra.mxu0 %v72
    %103 = vmatprep.subr.mxu0 0.0
    %104 = vmatpush1.msra.mxu0 %v71
    %105 = vmatprep.subr.mxu0 0.0
    %106 = vmatpush1.msra.mxu0 %v70
    %107 = vmatprep.subr.mxu0 0.0
    %108 = vmatpush1.msra.mxu0 %v69
    %109 = vmatprep.subr.mxu0 0.0
    %110 = vmatpush1.msra.mxu0 %v68
    %111 = vmatprep.subr.mxu0 0.0
    %112 = vmatpush1.msra.mxu0 %v67
    %113 = vmatprep.subr.mxu0 0.0
    %114 = vmatpush1.msra.mxu0 %v66
    %115 = vmatprep.subr.mxu0 0.0
    %116 = vmatpush1.msra.mxu0 %v65
    %117 = vmatprep.subr.mxu0 0.0
    %118 = vmatpush1.msra.mxu0 %v64
    %119 = vmatprep.subr.mxu0 0.0
    %120 = vmatpush2.msra.mxu0 0.0
    %121 = vmatprep.subr.mxu0 0.0
    %122 = vmatpush2.msra.mxu0 0.0
    %123 = vmatprep.subr.mxu0 0.0
    %124 = vmatpush2.msra.mxu0 0.0
    %125 = vmatprep.subr.mxu0 0.0
    %126 = vmatpush2.msra.mxu0 0.0
    %127 = vmatprep.subr.mxu0 0.0
    %128 = vmatpush2.msra.mxu0 0.0
    %129 = vmatprep.subr.mxu0 0.0
    %130 = vmatpush2.msra.mxu0 0.0
    %131 = vmatprep.subr.mxu0 0.0
    %132 = vmatpush2.msra.mxu0 0.0
    %133 = vmatprep.subr.mxu0 0.0
    %134 = vmatpush2.msra.mxu0 0.0
    %135 = vmatprep.subr.mxu0 0.0
    %136 = vmatpush2.msra.mxu0 0.0
    %137 = vmatprep.subr.mxu0 0.0
    %138 = vmatpush2.msra.mxu0 0.0
    %139 = vmatprep.subr.mxu0 0.0
    %140 = vmatpush2.msra.mxu0 0.0
    %141 = vmatprep.subr.mxu0 0.0
    %142 = vmatpush2.msra.mxu0 0.0
    %143 = vmatprep.subr.mxu0 0.0
    %144 = vmatpush2.msra.mxu0 0.0
    %145 = vmatprep.subr.mxu0 0.0
    %146 = vmatpush2.msra.mxu0 0.0
    %147 = vmatprep.subr.mxu0 0.0
    %148 = vmatpush2.msra.mxu0 0.0
    %149 = vmatprep.subr.mxu0 0.0
    %150 = vmatpush2.msra.mxu0 0.0
    %151 = vmatprep.mubr.f32.mxu0 0.0
    %152 = vmatmul.mubr.f32.gmra.mxu0 %v62
    %v153 = vpop.f32.mrf.mxu0
    %v154 = vadd.f32 %v85, %v153
    %v155 = vpop.f32.mrf.mxu0
    %156 = vmatprep.mubr.f32.mxu0 0.0
    %157 = vmatmul.mubr.f32.gmra.mxu0 %v63
    %v158 = vpop.f32.mrf.mxu0
    %v159 = vadd.f32 %v85, %v158
    %v160 = vpop.f32.mrf.mxu0
    %161 = vdwg.mxu0
    %v162 = vmax.f32 %v154, 0.0
    %v163 = vmax.f32 %v159, 0.0
    %v164 = vld [vmem:[#allocation7] sm:$0xff]
    %v165 = vld [vmem:[#allocation7 + $0x8] sm:$0xff]
    %v166 = vld [vmem:[#allocation7 + $0x10] sm:$0xff]
    %v167 = vld [vmem:[#allocation7 + $0x18] sm:$0xff]
    %v168 = vld [vmem:[#allocation7 + $0x20] sm:$0xff]
    %v169 = vld [vmem:[#allocation7 + $0x28] sm:$0xff]
    %v170 = vld [vmem:[#allocation7 + $0x30] sm:$0xff]
    %v171 = vld [vmem:[#allocation7 + $0x38] sm:$0xff]
    %v172 = vld [vmem:[#allocation7 + $0x40] sm:$0xff]
    %v173 = vld [vmem:[#allocation7 + $0x48] sm:$0xff]
    %v174 = vld [vmem:[#allocation7 + $0x50] sm:$0xff]
    %v175 = vld [vmem:[#allocation7 + $0x58] sm:$0xff]
    %v176 = vld [vmem:[#allocation7 + $0x60] sm:$0xff]
    %v177 = vld [vmem:[#allocation7 + $0x68] sm:$0xff]
    %v178 = vld [vmem:[#allocation7 + $0x70] sm:$0xff]
    %v179 = vld [vmem:[#allocation7 + $0x78] sm:$0xff]
    %v180 = vld [vmem:[%s4] sm:$0x1]
    %v182 = vlaneseq
    %v183 = vshrl.u32 %v182, 7
    %v184 = vsub.s32 0, %v183
    %v185 = vrot.slane %v180, %v184
    %187 = vmatprep.subr.mxu0 0.0
    %188 = vmatpush1.msra.mxu0 %v179
    %189 = vmatprep.subr.mxu0 0.0
    %190 = vmatpush1.msra.mxu0 %v178
    %191 = vmatprep.subr.mxu0 0.0
    %192 = vmatpush1.msra.mxu0 %v177
    %193 = vmatprep.subr.mxu0 0.0
    %194 = vmatpush1.msra.mxu0 %v176
    %195 = vmatprep.subr.mxu0 0.0
    %196 = vmatpush1.msra.mxu0 %v175
    %197 = vmatprep.subr.mxu0 0.0
    %198 = vmatpush1.msra.mxu0 %v174
    %199 = vmatprep.subr.mxu0 0.0
    %200 = vmatpush1.msra.mxu0 %v173
    %201 = vmatprep.subr.mxu0 0.0
    %202 = vmatpush1.msra.mxu0 %v172
    %203 = vmatprep.subr.mxu0 0.0
    %204 = vmatpush1.msra.mxu0 %v171
    %205 = vmatprep.subr.mxu0 0.0
    %206 = vmatpush1.msra.mxu0 %v170
    %207 = vmatprep.subr.mxu0 0.0
    %208 = vmatpush1.msra.mxu0 %v169
    %209 = vmatprep.subr.mxu0 0.0
    %210 = vmatpush1.msra.mxu0 %v168
    %211 = vmatprep.subr.mxu0 0.0
    %212 = vmatpush1.msra.mxu0 %v167
    %213 = vmatprep.subr.mxu0 0.0
    %214 = vmatpush1.msra.mxu0 %v166
    %215 = vmatprep.subr.mxu0 0.0
    %216 = vmatpush1.msra.mxu0 %v165
    %217 = vmatprep.subr.mxu0 0.0
    %218 = vmatpush1.msra.mxu0 %v164
    %219 = vmatprep.subr.mxu0 0.0
    %220 = vmatpush2.msra.mxu0 0.0
    %221 = vmatprep.subr.mxu0 0.0
    %222 = vmatpush2.msra.mxu0 0.0
    %223 = vmatprep.subr.mxu0 0.0
    %224 = vmatpush2.msra.mxu0 0.0
    %225 = vmatprep.subr.mxu0 0.0
    %226 = vmatpush2.msra.mxu0 0.0
    %227 = vmatprep.subr.mxu0 0.0
    %228 = vmatpush2.msra.mxu0 0.0
    %229 = vmatprep.subr.mxu0 0.0
    %230 = vmatpush2.msra.mxu0 0.0
    %231 = vmatprep.subr.mxu0 0.0
    %232 = vmatpush2.msra.mxu0 0.0
    %233 = vmatprep.subr.mxu0 0.0
    %234 = vmatpush2.msra.mxu0 0.0
    %235 = vmatprep.subr.mxu0 0.0
    %236 = vmatpush2.msra.mxu0 0.0
    %237 = vmatprep.subr.mxu0 0.0
    %238 = vmatpush2.msra.mxu0 0.0
    %239 = vmatprep.subr.mxu0 0.0
    %240 = vmatpush2.msra.mxu0 0.0
    %241 = vmatprep.subr.mxu0 0.0
    %242 = vmatpush2.msra.mxu0 0.0
    %243 = vmatprep.subr.mxu0 0.0
    %244 = vmatpush2.msra.mxu0 0.0
    %245 = vmatprep.subr.mxu0 0.0
    %246 = vmatpush2.msra.mxu0 0.0
    %247 = vmatprep.subr.mxu0 0.0
    %248 = vmatpush2.msra.mxu0 0.0
    %249 = vmatprep.subr.mxu0 0.0
    %250 = vmatpush2.msra.mxu0 0.0
    %251 = vmatprep.mubr.f32.mxu0 0.0
    %252 = vmatmul.mubr.f32.gmra.mxu0 %v162
    %v253 = vpop.f32.mrf.mxu0
    %v254 = vadd.f32 %v185, %v253
    %v255 = vpop.f32.mrf.mxu0
    %256 = vmatprep.mubr.f32.mxu0 0.0
    %257 = vmatmul.mubr.f32.gmra.mxu0 %v163
    %v258 = vpop.f32.mrf.mxu0
    %v259 = vadd.f32 %v185, %v258
    %v260 = vpop.f32.mrf.mxu0
    %261 = vdwg.mxu0
    %262 = vmax.xlane.f32.xlu0 %v254
    %v263 = vpop.xlane.xlu0 %262
    %264 = vmax.xlane.f32.xlu0 %v259
    %v265 = vpop.xlane.xlu0 %264
    %v266 = vsub.f32 %v254, %v263
    %v267 = vsub.f32 %v259, %v265
    %v268 = vmul.f32 %v266, 1.442695
    %v269 = vpow.pop %v268
    %v270 = vmul.f32 %v267, 1.442695
    %v271 = vpow.pop %v270
    %272 = vadd.xlane.f32.xlu0 %v269
    %v273 = vpop.xlane.xlu0 %272
    %274 = vadd.xlane.f32.xlu0 %v271
    %v275 = vpop.xlane.xlu0 %274
    %v276 = vlog2.pop %v273
    %v277 = vmul.f32 %v276, 0.6931472
    %v278 = vlog2.pop %v275
    %v279 = vmul.f32 %v278, 0.6931472
    %v280 = vsub.f32 %v266, %v277
    %v281 = vsub.f32 %v267, %v279
    %282 = vst [vmem:[#allocation8] sm:$0xff] %v280
    %283 = vst [vmem:[#allocation8 + $0x8] sm:$0xff] %v281
    // Predicated region
    $region34: #{tpu_custom_call.1} parent=1 // pred_check
      _
    $region35: #{tpu_custom_call.1} parent=1 // pred_check_branch
      %285 = sbr.rel (0) target = $region37
    $region36: #{tpu_custom_call.1} parent=1 // pred_region
      %s287 = ssub.s32 256, 32
      %288 = vsyncadd [#allocation4], %s287
      %s289 = sshll.u32 [#allocation8], 4
      %s290 = int_to_ptr.vmem [resolvable:$true] %s289
      %295 = dma.vmem_to_hbm [thread:$0]  %s290, 32, %s5, [#allocation4], 32, 32, 2
    $region37: #{tpu_custom_call.1} parent=1 // pred_fallthru
      _
    // Predicated region
    $region38: #{tpu_custom_call.1} parent=1 // pred_check
      _
    $region39: #{tpu_custom_call.1} parent=1 // pred_check_branch
      %297 = sbr.rel (0) target = $region41
    $region40: #{tpu_custom_call.1} parent=1 // pred_region
      %298 = dma.done [#allocation4], 256
    $region41: #{tpu_custom_call.1} parent=1 // pred_fallthru
      _
    %299 = vsyncpa [#allocation3], 1
    %300 = vsyncpa [#allocation6], 1
    %301 = vsyncpa [#allocation4], 1

// kernel: tpu_custom_call.1
$region0: #{tpu_custom_call.1}
  #allocation0 [shape = 'u32[]', space=smem, size = 0x4, offset = 0x4, fixed_abs, tag = 'smem constant byte address 0x4 - core index']
  #allocation1 [shape = 'u32[144,128]{1,0:T(1,128)}', space=vmem, size = 0x12000, scoped, tag = 'internal scratch']
  %s0 = inlined_call_operand.hbm [shape: f32[2,128], index: 0, kind: input, shape index: {}]
  %s1 = inlined_call_operand.hbm [shape: f32[128,128], index: 1, kind: input, shape index: {}]
  %s2 = inlined_call_operand.vmem [shape: f32[1,128], index: 2, kind: input, shape index: {}]
  %s3 = inlined_call_operand.hbm [shape: f32[128,128], index: 3, kind: input, shape index: {}]
  %s4 = inlined_call_operand.vmem [shape: f32[1,128], index: 4, kind: input, shape index: {}]
  %s5 = inlined_call_operand.hbm [shape: f32[2,128], index: 5, kind: output, shape index: {}]
  %s6 = sld [smem:[#allocation0]]
  $region42: #{tpu_custom_call.1} parent=0
    _
  %s8 = ssub.s32 1, %s6
  %s9 = scalar_select 0, %s8, %s6
  $region1: #{tpu_custom_call.1} parent=0
    #allocation2 [shape = 'u8[8192]{0}', space=vmem, size = 0x2000, scoped, tag = 'input window, operand 0, single buffered']
    #allocation3 [shape = 's32[1]{0}', space=sflag, size = 0x4, scoped, tag = 'scoped memory for tpu_custom_call.1']
    #allocation4 [shape = 's32[1]{0}', space=sflag, size = 0x4, scoped, tag = 'scoped memory for tpu_custom_call.1']
    #allocation5 [shape = 'u8[65536]{0}', space=vmem, size = 0x10000, scoped, tag = 'input window, operand 1, single buffered']
    #allocation6 [shape = 's32[1]{0}', space=sflag, size = 0x4, scoped, tag = 'scoped memory for tpu_custom_call.1']
    #allocation7 [shape = 'u8[65536]{0}', space=vmem, size = 0x10000, scoped, tag = 'input window, operand 3, single buffered']
    #allocation8 [shape = 'u8[8192]{0}', space=vmem, size = 0x2000, scoped, tag = 'output window, operand 0, single buffered']
    %10 = vsyncpa [#allocation3], 0
    %11 = vsyncpa [#allocation6], 0
    %12 = vsyncpa [#allocation4], 0
    // Predicated region
    $region2: #{tpu_custom_call.1} parent=1 // pred_check
      _
    $region3: #{tpu_custom_call.1} parent=1 // pred_check_branch
      %14 = sbr.rel (0) target = $region5
    $region4: #{tpu_custom_call.1} parent=1 // pred_region
      %s16 = ssub.s32 256, 32
      %17 = vsyncadd [#allocation3], %s16
      %s18 = sshll.u32 [#allocation2], 4
      %s19 = int_to_ptr.vmem [resolvable:$true] %s18
      %24 = dma.hbm_to_vmem [thread:$0]  %s0, 32, %s19, [#allocation3], 32, 32, 2
    $region5: #{tpu_custom_call.1} parent=1 // pred_fallthru
      _
    // Predicated region
    $region6: #{tpu_custom_call.1} parent=1 // pred_check
      _
    $region7: #{tpu_custom_call.1} parent=1 // pred_check_branch
      %26 = sbr.rel (0) target = $region9
    $region8: #{tpu_custom_call.1} parent=1 // pred_region
      %s28 = ssub.s32 2048, 2048
      %29 = vsyncadd [#allocation6], %s28
      %s30 = sshll.u32 [#allocation5], 4
      %s31 = int_to_ptr.vmem [resolvable:$true] %s30
      %36 = dma.hbm_to_vmem [thread:$0]  %s1, 2048, %s31, [#allocation6], 128, 128, 8
    $region9: #{tpu_custom_call.1} parent=1 // pred_fallthru
      _
    // Predicated region
    $region10: #{tpu_custom_call.1} parent=1 // pred_check
      _
    $region11: #{tpu_custom_call.1} parent=1 // pred_check_branch
      %38 = sbr.rel (0) target = $region13
    $region12: #{tpu_custom_call.1} parent=1 // pred_region
      _
    $region13: #{tpu_custom_call.1} parent=1 // pred_fallthru
      _
    // Predicated region
    $region14: #{tpu_custom_call.1} parent=1 // pred_check
      _
    $region15: #{tpu_custom_call.1} parent=1 // pred_check_branch
      %40 = sbr.rel (0) target = $region17
    $region16: #{tpu_custom_call.1} parent=1 // pred_region
      %s42 = ssub.s32 2048, 2048
      %43 = vsyncadd [#allocation6], %s42
      %s44 = sshll.u32 [#allocation7], 4
      %s45 = int_to_ptr.vmem [resolvable:$true] %s44
      %50 = dma.hbm_to_vmem [thread:$0]  %s3, 2048, %s45, [#allocation6], 128, 128, 8
    $region17: #{tpu_custom_call.1} parent=1 // pred_fallthru
      _
    // Predicated region
    $region18: #{tpu_custom_call.1} parent=1 // pred_check
      _
    $region19: #{tpu_custom_call.1} parent=1 // pred_check_branch
      %52 = sbr.rel (0) target = $region21
    $region20: #{tpu_custom_call.1} parent=1 // pred_region
      _
    $region21: #{tpu_custom_call.1} parent=1 // pred_fallthru
      _
    // Predicated region
    $region22: #{tpu_custom_call.1} parent=1 // pred_check
      _
    $region23: #{tpu_custom_call.1} parent=1 // pred_check_branch
      %54 = sbr.rel (0) target = $region25
    $region24: #{tpu_custom_call.1} parent=1 // pred_region
      %55 = dma.done [#allocation3], 256
    $region25: #{tpu_custom_call.1} parent=1 // pred_fallthru
      _
    // Predicated region
    $region26: #{tpu_custom_call.1} parent=1 // pred_check
      _
    $region27: #{tpu_custom_call.1} parent=1 // pred_check_branch
      %57 = sbr.rel (0) target = $region29
    $region28: #{tpu_custom_call.1} parent=1 // pred_region
      %58 = dma.done [#allocation6], 2048
    $region29: #{tpu_custom_call.1} parent=1 // pred_fallthru
      _
    // Predicated region
    $region30: #{tpu_custom_call.1} parent=1 // pred_check
      _
    $region31: #{tpu_custom_call.1} parent=1 // pred_check_branch
      %60 = sbr.rel (0) target = $region33
    $region32: #{tpu_custom_call.1} parent=1 // pred_region
      %61 = dma.done [#allocation6], 2048
    $region33: #{tpu_custom_call.1} parent=1 // pred_fallthru
      _
    %v62 = vld [vmem:[#allocation2] sm:$0xff]
    %v63 = vld [vmem:[#allocation2 + $0x8] sm:$0xff]
    %v64 = vld [vmem:[#allocation5] sm:$0xff]
    %v65 = vld [vmem:[#allocation5 + $0x8] sm:$0xff]
    %v66 = vld [vmem:[#allocation5 + $0x10] sm:$0xff]
    %v67 = vld [vmem:[#allocation5 + $0x18] sm:$0xff]
    %v68 = vld [vmem:[#allocation5 + $0x20] sm:$0xff]
    %v69 = vld [vmem:[#allocation5 + $0x28] sm:$0xff]
    %v70 = vld [vmem:[#allocation5 + $0x30] sm:$0xff]
    %v71 = vld [vmem:[#allocation5 + $0x38] sm:$0xff]
    %v72 = vld [vmem:[#allocation5 + $0x40] sm:$0xff]
    %v73 = vld [vmem:[#allocation5 + $0x48] sm:$0xff]
    %v74 = vld [vmem:[#allocation5 + $0x50] sm:$0xff]
    %v75 = vld [vmem:[#allocation5 + $0x58] sm:$0xff]
    %v76 = vld [vmem:[#allocation5 + $0x60] sm:$0xff]
    %v77 = vld [vmem:[#allocation5 + $0x68] sm:$0xff]
    %v78 = vld [vmem:[#allocation5 + $0x70] sm:$0xff]
    %v79 = vld [vmem:[#allocation5 + $0x78] sm:$0xff]
    %v80 = vld [vmem:[%s2] sm:$0x1]
    %v82 = vlaneseq
    %v83 = vshrl.u32 %v82, 7
    %v84 = vsub.s32 0, %v83
    %v85 = vrot.slane %v80, %v84
    %87 = vmatprep.subr.mxu0 0.0
    %88 = vmatpush1.msra.mxu0 %v79
    %89 = vmatprep.subr.mxu0 0.0
    %90 = vmatpush1.msra.mxu0 %v78
    %91 = vmatprep.subr.mxu0 0.0
    %92 = vmatpush1.msra.mxu0 %v77
    %93 = vmatprep.subr.mxu0 0.0
    %94 = vmatpush1.msra.mxu0 %v76
    %95 = vmatprep.subr.mxu0 0.0
    %96 = vmatpush1.msra.mxu0 %v75
    %97 = vmatprep.subr.mxu0 0.0
    %98 = vmatpush1.msra.mxu0 %v74
    %99 = vmatprep.subr.mxu0 0.0
    %100 = vmatpush1.msra.mxu0 %v73
    %101 = vmatprep.subr.mxu0 0.0
    %102 = vmatpush1.msra.mxu0 %v72
    %103 = vmatprep.subr.mxu0 0.0
    %104 = vmatpush1.msra.mxu0 %v71
    %105 = vmatprep.subr.mxu0 0.0
    %106 = vmatpush1.msra.mxu0 %v70
    %107 = vmatprep.subr.mxu0 0.0
    %108 = vmatpush1.msra.mxu0 %v69
    %109 = vmatprep.subr.mxu0 0.0
    %110 = vmatpush1.msra.mxu0 %v68
    %111 = vmatprep.subr.mxu0 0.0
    %112 = vmatpush1.msra.mxu0 %v67
    %113 = vmatprep.subr.mxu0 0.0
    %114 = vmatpush1.msra.mxu0 %v66
    %115 = vmatprep.subr.mxu0 0.0
    %116 = vmatpush1.msra.mxu0 %v65
    %117 = vmatprep.subr.mxu0 0.0
    %118 = vmatpush1.msra.mxu0 %v64
    %119 = vmatprep.subr.mxu0 0.0
    %120 = vmatpush2.msra.mxu0 0.0
    %121 = vmatprep.subr.mxu0 0.0
    %122 = vmatpush2.msra.mxu0 0.0
    %123 = vmatprep.subr.mxu0 0.0
    %124 = vmatpush2.msra.mxu0 0.0
    %125 = vmatprep.subr.mxu0 0.0
    %126 = vmatpush2.msra.mxu0 0.0
    %127 = vmatprep.subr.mxu0 0.0
    %128 = vmatpush2.msra.mxu0 0.0
    %129 = vmatprep.subr.mxu0 0.0
    %130 = vmatpush2.msra.mxu0 0.0
    %131 = vmatprep.subr.mxu0 0.0
    %132 = vmatpush2.msra.mxu0 0.0
    %133 = vmatprep.subr.mxu0 0.0
    %134 = vmatpush2.msra.mxu0 0.0
    %135 = vmatprep.subr.mxu0 0.0
    %136 = vmatpush2.msra.mxu0 0.0
    %137 = vmatprep.subr.mxu0 0.0
    %138 = vmatpush2.msra.mxu0 0.0
    %139 = vmatprep.subr.mxu0 0.0
    %140 = vmatpush2.msra.mxu0 0.0
    %141 = vmatprep.subr.mxu0 0.0
    %142 = vmatpush2.msra.mxu0 0.0
    %143 = vmatprep.subr.mxu0 0.0
    %144 = vmatpush2.msra.mxu0 0.0
    %145 = vmatprep.subr.mxu0 0.0
    %146 = vmatpush2.msra.mxu0 0.0
    %147 = vmatprep.subr.mxu0 0.0
    %148 = vmatpush2.msra.mxu0 0.0
    %149 = vmatprep.subr.mxu0 0.0
    %150 = vmatpush2.msra.mxu0 0.0
    %151 = vmatprep.mubr.f32.mxu0 0.0
    %152 = vmatmul.mubr.f32.gmra.mxu0 %v62
    %v153 = vpop.f32.mrf.mxu0
    %v154 = vadd.f32 %v85, %v153
    %v155 = vpop.f32.mrf.mxu0
    %156 = vmatprep.mubr.f32.mxu0 0.0
    %157 = vmatmul.mubr.f32.gmra.mxu0 %v63
    %v158 = vpop.f32.mrf.mxu0
    %v159 = vadd.f32 %v85, %v158
    %v160 = vpop.f32.mrf.mxu0
    %161 = vdwg.mxu0
    %v162 = vmax.f32 %v154, 0.0
    %v163 = vmax.f32 %v159, 0.0
    %v164 = vld [vmem:[#allocation7] sm:$0xff]
    %v165 = vld [vmem:[#allocation7 + $0x8] sm:$0xff]
    %v166 = vld [vmem:[#allocation7 + $0x10] sm:$0xff]
    %v167 = vld [vmem:[#allocation7 + $0x18] sm:$0xff]
    %v168 = vld [vmem:[#allocation7 + $0x20] sm:$0xff]
    %v169 = vld [vmem:[#allocation7 + $0x28] sm:$0xff]
    %v170 = vld [vmem:[#allocation7 + $0x30] sm:$0xff]
    %v171 = vld [vmem:[#allocation7 + $0x38] sm:$0xff]
    %v172 = vld [vmem:[#allocation7 + $0x40] sm:$0xff]
    %v173 = vld [vmem:[#allocation7 + $0x48] sm:$0xff]
    %v174 = vld [vmem:[#allocation7 + $0x50] sm:$0xff]
    %v175 = vld [vmem:[#allocation7 + $0x58] sm:$0xff]
    %v176 = vld [vmem:[#allocation7 + $0x60] sm:$0xff]
    %v177 = vld [vmem:[#allocation7 + $0x68] sm:$0xff]
    %v178 = vld [vmem:[#allocation7 + $0x70] sm:$0xff]
    %v179 = vld [vmem:[#allocation7 + $0x78] sm:$0xff]
    %v180 = vld [vmem:[%s4] sm:$0x1]
    %v182 = vlaneseq
    %v183 = vshrl.u32 %v182, 7
    %v184 = vsub.s32 0, %v183
    %v185 = vrot.slane %v180, %v184
    %187 = vmatprep.subr.mxu0 0.0
    %188 = vmatpush1.msra.mxu0 %v179
    %189 = vmatprep.subr.mxu0 0.0
    %190 = vmatpush1.msra.mxu0 %v178
    %191 = vmatprep.subr.mxu0 0.0
    %192 = vmatpush1.msra.mxu0 %v177
    %193 = vmatprep.subr.mxu0 0.0
    %194 = vmatpush1.msra.mxu0 %v176
    %195 = vmatprep.subr.mxu0 0.0
    %196 = vmatpush1.msra.mxu0 %v175
    %197 = vmatprep.subr.mxu0 0.0
    %198 = vmatpush1.msra.mxu0 %v174
    %199 = vmatprep.subr.mxu0 0.0
    %200 = vmatpush1.msra.mxu0 %v173
    %201 = vmatprep.subr.mxu0 0.0
    %202 = vmatpush1.msra.mxu0 %v172
    %203 = vmatprep.subr.mxu0 0.0
    %204 = vmatpush1.msra.mxu0 %v171
    %205 = vmatprep.subr.mxu0 0.0
    %206 = vmatpush1.msra.mxu0 %v170
    %207 = vmatprep.subr.mxu0 0.0
    %208 = vmatpush1.msra.mxu0 %v169
    %209 = vmatprep.subr.mxu0 0.0
    %210 = vmatpush1.msra.mxu0 %v168
    %211 = vmatprep.subr.mxu0 0.0
    %212 = vmatpush1.msra.mxu0 %v167
    %213 = vmatprep.subr.mxu0 0.0
    %214 = vmatpush1.msra.mxu0 %v166
    %215 = vmatprep.subr.mxu0 0.0
    %216 = vmatpush1.msra.mxu0 %v165
    %217 = vmatprep.subr.mxu0 0.0
    %218 = vmatpush1.msra.mxu0 %v164
    %219 = vmatprep.subr.mxu0 0.0
    %220 = vmatpush2.msra.mxu0 0.0
    %221 = vmatprep.subr.mxu0 0.0
    %222 = vmatpush2.msra.mxu0 0.0
    %223 = vmatprep.subr.mxu0 0.0
    %224 = vmatpush2.msra.mxu0 0.0
    %225 = vmatprep.subr.mxu0 0.0
    %226 = vmatpush2.msra.mxu0 0.0
    %227 = vmatprep.subr.mxu0 0.0
    %228 = vmatpush2.msra.mxu0 0.0
    %229 = vmatprep.subr.mxu0 0.0
    %230 = vmatpush2.msra.mxu0 0.0
    %231 = vmatprep.subr.mxu0 0.0
    %232 = vmatpush2.msra.mxu0 0.0
    %233 = vmatprep.subr.mxu0 0.0
    %234 = vmatpush2.msra.mxu0 0.0
    %235 = vmatprep.subr.mxu0 0.0
    %236 = vmatpush2.msra.mxu0 0.0
    %237 = vmatprep.subr.mxu0 0.0
    %238 = vmatpush2.msra.mxu0 0.0
    %239 = vmatprep.subr.mxu0 0.0
    %240 = vmatpush2.msra.mxu0 0.0
    %241 = vmatprep.subr.mxu0 0.0
    %242 = vmatpush2.msra.mxu0 0.0
    %243 = vmatprep.subr.mxu0 0.0
    %244 = vmatpush2.msra.mxu0 0.0
    %245 = vmatprep.subr.mxu0 0.0
    %246 = vmatpush2.msra.mxu0 0.0
    %247 = vmatprep.subr.mxu0 0.0
    %248 = vmatpush2.msra.mxu0 0.0
    %249 = vmatprep.subr.mxu0 0.0
    %250 = vmatpush2.msra.mxu0 0.0
    %251 = vmatprep.mubr.f32.mxu0 0.0
    %252 = vmatmul.mubr.f32.gmra.mxu0 %v162
    %v253 = vpop.f32.mrf.mxu0
    %v254 = vadd.f32 %v185, %v253
    %v255 = vpop.f32.mrf.mxu0
    %256 = vmatprep.mubr.f32.mxu0 0.0
    %257 = vmatmul.mubr.f32.gmra.mxu0 %v163
    %v258 = vpop.f32.mrf.mxu0
    %v259 = vadd.f32 %v185, %v258
    %v260 = vpop.f32.mrf.mxu0
    %261 = vdwg.mxu0
    %262 = vmax.xlane.f32.xlu0 %v254
    %v263 = vpop.xlane.xlu0 %262
    %264 = vmax.xlane.f32.xlu0 %v259
    %v265 = vpop.xlane.xlu0 %264
    %v266 = vsub.f32 %v254, %v263
    %v267 = vsub.f32 %v259, %v265
    %v268 = vmul.f32 %v266, 1.442695
    %v269 = vpow.pop %v268
    %v270 = vmul.f32 %v267, 1.442695
    %v271 = vpow.pop %v270
    %272 = vadd.xlane.f32.xlu0 %v269
    %v273 = vpop.xlane.xlu0 %272
    %274 = vadd.xlane.f32.xlu0 %v271
    %v275 = vpop.xlane.xlu0 %274
    %v276 = vlog2.pop %v273
    %v277 = vmul.f32 %v276, 0.6931472
    %v278 = vlog2.pop %v275
    %v279 = vmul.f32 %v278, 0.6931472
    %v280 = vsub.f32 %v266, %v277
    %v281 = vsub.f32 %v267, %v279
    %282 = vst [vmem:[#allocation8] sm:$0xff] %v280
    %283 = vst [vmem:[#allocation8 + $0x8] sm:$0xff] %v281
    // Predicated region
    $region34: #{tpu_custom_call.1} parent=1 // pred_check
      _
    $region35: #{tpu_custom_call.1} parent=1 // pred_check_branch
      %285 = sbr.rel (0) target = $region37
    $region36: #{tpu_custom_call.1} parent=1 // pred_region
      %s287 = ssub.s32 256, 32
      %288 = vsyncadd [#allocation4], %s287
      %s289 = sshll.u32 [#allocation8], 4
      %s290 = int_to_ptr.vmem [resolvable:$true] %s289
      %295 = dma.vmem_to_hbm [thread:$0]  %s290, 32, %s5, [#allocation4], 32, 32, 2
    $region37: #{tpu_custom_call.1} parent=1 // pred_fallthru
      _
    // Predicated region
    $region38: #{tpu_custom_call.1} parent=1 // pred_check
      _
    $region39: #{tpu_custom_call.1} parent=1 // pred_check_branch
      %297 = sbr.rel (0) target = $region41
    $region40: #{tpu_custom_call.1} parent=1 // pred_region
      %298 = dma.done [#allocation4], 256
    $region41: #{tpu_custom_call.1} parent=1 // pred_fallthru
      _
    %299 = vsyncpa [#allocation3], 1
    %300 = vsyncpa [#allocation6], 1
    %301 = vsyncpa [#allocation4], 1

</llo_original>
